<compile_context>
chip_gen: v7x
topology: tpu7x:2x2x1
jax: 0.10.0
libtpu: 0.0.40
codegen_flags: <defaults>
</compile_context>

<pallas_src>
import jax
import jax.numpy as jnp
import numpy as np
from jax.experimental import pallas as pl
from jax.experimental.pallas import tpu as pltpu


def _patch_proj_kernel(p_ref, w_ref, add_ref, out_ref):
    """out = patches @ W + (bias + pos) for one (hidden-tile, row-tile) step.

    p_ref:   (tm, K_p)  flattened patch rows (row 0 of each image is zeros)
    w_ref:   (K_p, tn)  conv weight, lane/contraction padded
    add_ref: (tm, tn)   per-row add table (f32): cls+pos[0] / bias+pos[1:]
    out_ref: (tm, tn)
    """
    proj = jnp.dot(p_ref[...], w_ref[...],
                   preferred_element_type=jnp.float32)      # MXU, f32 accumulate
    out_ref[...] = (proj + add_ref[...]).astype(out_ref.dtype)


def _round_up(x, m):
    return ((x + m - 1) // m) * m


def _select_tiling(batch, rows_per_image, k_p, hidden_p, op_bytes, out_bytes,
                   sublane_pref, target_rows=1024,
                   vmem_budget=24 * 1024 * 1024):
    """Pick (images_per_tile, tn).

    Row tiles hold whole images (so the add table is block-index-constant).
    tn == hidden_p whenever the full weight + tiles fit the VMEM budget, which
    collapses the hidden grid axis and keeps W / add resident in VMEM.
    The budget leaves headroom under the 32 MiB scoped limit (and v7x VMEM).
    """
    tn_candidates = [hidden_p] + [t for t in (512, 256, 128)
                                  if t < hidden_p and hidden_p % t == 0]
    divisors = [d for d in range(1, batch + 1) if batch % d == 0]
    sublanes = [sublane_pref] if sublane_pref == 8 else [sublane_pref, 8]

    def aligned(d, s):
        return (d * rows_per_image) % s == 0 or d == batch

    def footprint(d, tn):
        tm = d * rows_per_image
        return (2 * tm * k_p * op_bytes          # patches tile (double-buffered)
                + 2 * k_p * tn * op_bytes        # weight
                + 2 * tm * tn * 4                # f32 add table
                + 2 * tm * tn * out_bytes)       # output tile

    for tn in tn_candidates:
        for s in sublanes:
            ok = [d for d in divisors
                  if aligned(d, s) and footprint(d, tn) <= vmem_budget]
            if ok:
                reach = [d for d in ok if d * rows_per_image >= target_rows]
                # smallest tile reaching the target keeps >=2 row-grid steps
                # when possible (v7x dual TensorCore) and the MXU M dim tall.
                return (min(reach) if reach else max(ok)), tn
    # Nothing fits the budget: smallest aligned row tile, smallest hidden tile.
    tn = tn_candidates[-1]
    for s in sublanes:
        ok = [d for d in divisors if aligned(d, s)]
        if ok:
            return min(ok), tn
    return batch, tn


def embeddings_forward(x, conv_w, conv_b, cls_token, pos_emb, patch_size,
                       *, compute_dtype=jnp.bfloat16, out_dtype=None):
    """ViT Embeddings forward.

    x: (B, C, H, W) NCHW.  Returns (B, n_patches + 1, hidden).

    compute_dtype: dtype of the matmul operands (default bf16, the native MXU
    input on v5e/v6e/v7x; accumulation and the bias/pos add stay in f32).
    Pass None to keep operands in the input dtype (f32-exact parity path).
    """
    B, C, H, W = x.shape
    ph, pw = patch_size
    gh, gw = H // ph, W // pw
    n_patches = gh * gw
    rows_per_image = n_patches + 1            # row 0 of each image = cls row
    hidden = conv_w.shape[0]
    K = C * ph * pw
    out_dtype = x.dtype if out_dtype is None else out_dtype
    op_dtype = x.dtype if compute_dtype is None else compute_dtype

    # --- patchify (Conv2d stride==kernel) + one zero "cls" row per image ----
    # matches Conv2d(stride=kernel) -> flatten(2) -> transpose(-1, -2)
    patches = x.reshape(B, C, gh, ph, gw, pw)
    patches = patches.transpose(0, 2, 4, 1, 3, 5)       # (B, gh, gw, C, ph, pw)
    patches = patches.reshape(B, n_patches, K)
    # zero row per image: 0 @ W + add_row0 == cls_token + pos[0], so the
    # kernel emits the full (B, N+1, hidden) output with no concatenate.
    patches = jnp.concatenate(
        [jnp.zeros((B, 1, K), patches.dtype), patches], axis=1)
    patches = patches.reshape(B * rows_per_image, K)

    # --- lane alignment: pad K and hidden up to multiples of 128 ------------
    k_p = _round_up(K, 128)
    hidden_p = _round_up(hidden, 128)

    # conv weight (hidden, C, ph, pw) -> (K, hidden), same (c, i, j) ordering
    w_mat = conv_w.reshape(hidden, K).T                  # (K, hidden)
    if k_p != K:
        patches = jnp.pad(patches, ((0, 0), (0, k_p - K)))
        w_mat = jnp.pad(w_mat, ((0, k_p - K), (0, 0)))
    if hidden_p != hidden:
        w_mat = jnp.pad(w_mat, ((0, 0), (0, hidden_p - hidden)))

    patches = patches.astype(op_dtype)
    w_mat = w_mat.astype(op_dtype)

    # --- fold cls / conv bias / position embeddings into one add table ------
    cls_row = (cls_token.reshape(1, hidden).astype(jnp.float32)
               + pos_emb[0, 0:1, :].astype(jnp.float32))          # (1, hidden)
    patch_rows = (conv_b[None, :].astype(jnp.float32)
                  + pos_emb[0, 1:, :].astype(jnp.float32))        # (N, hidden)
    add_tab = jnp.concatenate([cls_row, patch_rows], axis=0)      # (N+1, hidden)
    if hidden_p != hidden:
        add_tab = jnp.pad(add_tab, ((0, 0), (0, hidden_p - hidden)))

    # --- tiling ---------------------------------------------------------------
    op_bytes = np.dtype(op_dtype).itemsize
    out_bytes = np.dtype(out_dtype).itemsize
    sublane_pref = 8 if op_bytes >= 4 else (16 if op_bytes == 2 else 32)
    images_per_tile, tn = _select_tiling(
        B, rows_per_image, k_p, hidden_p, op_bytes, out_bytes, sublane_pref)
    tm = images_per_tile * rows_per_image
    total_rows = B * rows_per_image

    # Whole images per row tile -> the add table is identical for every row
    # tile; its block index is constant so Pallas DMAs it exactly once.
    add_block = jnp.tile(add_tab, (images_per_tile, 1))            # (tm, hidden_p)

    # grid: hidden tiles OUTER, row tiles INNER -> W / add block indices are
    # constant across the inner axis (no re-streaming across row tiles).
    grid = (hidden_p // tn, total_rows // tm)

    out = pl.pallas_call(
        _patch_proj_kernel,
        out_shape=jax.ShapeDtypeStruct((total_rows, hidden_p), out_dtype),
        grid_spec=pltpu.PrefetchScalarGridSpec(
            num_scalar_prefetch=0,
            grid=grid,
            in_specs=[
                pl.BlockSpec((tm, k_p), lambda j, i: (i, 0)),   # patches
                pl.BlockSpec((k_p, tn), lambda j, i: (0, j)),   # weight (resident)
                pl.BlockSpec((tm, tn), lambda j, i: (0, j)),    # add   (resident)
            ],
            out_specs=pl.BlockSpec((tm, tn), lambda j, i: (i, j)),
        ),
        compiler_params=pltpu.CompilerParams(
            dimension_semantics=("parallel", "parallel"),
            # Let XLA fuse the patchify reshape/transpose/pad/cast into the
            # patches operand instead of materializing it in HBM first.
            allow_input_fusion=[True, False, False],
            vmem_limit_bytes=32 * 1024 * 1024,
        ),
    )(patches, w_mat, add_block)

    # Dropout (eval mode) is the identity.
    # strip lane padding; rows already include the per-image cls row.
    return out[:, :hidden].reshape(B, rows_per_image, hidden)


def _reference_forward(x, conv_w, conv_b, cls_token, pos_emb, patch_size):
    """Plain-JAX reference mirroring the PyTorch forward (dropout in eval)."""
    B = x.shape[0]
    hidden = conv_w.shape[0]
    y = jax.lax.conv_general_dilated(
        x, conv_w, window_strides=patch_size, padding="VALID",
        dimension_numbers=("NCHW", "OIHW", "NCHW"))
    y = y + conv_b.reshape(1, hidden, 1, 1)
    y = y.reshape(B, hidden, -1)                # flatten(2)
    y = jnp.transpose(y, (0, 2, 1))             # transpose(-1, -2)
    cls = jnp.broadcast_to(cls_token, (B, 1, hidden))
    y = jnp.concatenate([cls, y], axis=1)
    return y + pos_emb                          # (1, N+1, H) broadcast over B


if __name__ == "__main__":
    def _run_case(key, B, C, H, W, patch_size, hidden, compute_dtype,
                  rtol, atol):
        n_patches = (H // patch_size[0]) * (W // patch_size[1])
        kx, kw, kb, kc, kp = jax.random.split(key, 5)
        x = jax.random.normal(kx, (B, C, H, W), dtype=jnp.float32)
        conv_w = jax.random.normal(
            kw, (hidden, C, patch_size[0], patch_size[1]),
            dtype=jnp.float32) * 0.05
        conv_b = jax.random.normal(kb, (hidden,), dtype=jnp.float32) * 0.05
        cls_token = jax.random.normal(kc, (1, 1, hidden),
                                      dtype=jnp.float32) * 0.02
        pos_emb = jax.random.normal(kp, (1, n_patches + 1, hidden),
                                    dtype=jnp.float32) * 0.02

        out = embeddings_forward(x, conv_w, conv_b, cls_token, pos_emb,
                                 patch_size, compute_dtype=compute_dtype)
        out = jax.block_until_ready(out)
        ref = jax.block_until_ready(
            _reference_forward(x, conv_w, conv_b, cls_token, pos_emb,
                               patch_size))

        assert out.shape == (B, n_patches + 1, hidden), out.shape
        np.testing.assert_allclose(np.asarray(out), np.asarray(ref),
                                   rtol=rtol, atol=atol)

    key = jax.random.PRNGKey(0)
    k1, k2, k3 = jax.random.split(key, 3)

    # 1) f32-exact path, lane-dense hidden (multiple of 128).
    _run_case(k1, 2, 4, 16, 16, (4, 4), 128, None, 1e-5, 1e-5)
    # 2) Narrow hidden (=32): exercises the hidden lane-padding path, f32.
    _run_case(k2, 2, 4, 16, 16, (4, 4), 32, None, 1e-5, 1e-5)
    # 3) Default bf16 operand path (native MXU input), looser tolerance.
    _run_case(k3, 2, 4, 16, 16, (4, 4), 128, jnp.bfloat16, 2e-2, 2e-2)

    print("KERNEL_OK")
</pallas_src>

<mosaic_0001>
module attributes {stable_mosaic.version = 11 : i64} {
  func.func @_patch_proj_kernel(%arg0: i32, %arg1: i32, %arg2: memref<34x128xf32, #tpu.memory_space<vmem>>, %arg3: memref<128x128xf32, #tpu.memory_space<vmem>>, %arg4: memref<34x128xf32, #tpu.memory_space<vmem>>, %arg5: memref<34x128xf32, #tpu.memory_space<vmem>>) attributes {dimension_semantics = [#tpu.dimension_semantics<parallel>, #tpu.dimension_semantics<parallel>], iteration_bounds = array<i64: 1, 1>, scalar_prefetch = 0 : i64, scratch_operands = 0 : i64, tpu.core_type = #tpu.core_type<tc>, window_params = [{transform_indices = @transform_0, window_bounds = array<i64: 34, 128>}, {transform_indices = @transform_1, window_bounds = array<i64: 128, 128>}, {transform_indices = @transform_2, window_bounds = array<i64: 34, 128>}, {transform_indices = @transform_3, window_bounds = array<i64: 34, 128>}]} {
    %c0 = arith.constant 0 : index
    %c0_0 = arith.constant 0 : index
    %0 = vector.load %arg2[%c0, %c0_0] : memref<34x128xf32, #tpu.memory_space<vmem>>, vector<34x128xf32>
    %c0_1 = arith.constant 0 : index
    %c0_2 = arith.constant 0 : index
    %1 = vector.load %arg3[%c0_1, %c0_2] : memref<128x128xf32, #tpu.memory_space<vmem>>, vector<128x128xf32>
    %cst = arith.constant dense<0.000000e+00> : vector<34x128xf32>
    %2 = tpu.matmul %0, %1, %cst {dimension_numbers = #tpu.dot_dimension_numbers<[1], [0], [0], [1], [0, 0, 1, 1], [], []>} : vector<34x128xf32>, vector<128x128xf32>, vector<34x128xf32> -> vector<34x128xf32>
    %c0_3 = arith.constant 0 : index
    %c0_4 = arith.constant 0 : index
    %3 = vector.load %arg4[%c0_3, %c0_4] : memref<34x128xf32, #tpu.memory_space<vmem>>, vector<34x128xf32>
    %4 = arith.addf %2, %3 : vector<34x128xf32>
    %c0_5 = arith.constant 0 : index
    %c0_6 = arith.constant 0 : index
    %5 = vector.load %arg5[%c0_5, %c0_6] : memref<34x128xf32, #tpu.memory_space<vmem>>, vector<34x128xf32>
    tpu.vector_store %arg5[%c0_5, %c0_6], %4 {strides = array<i32>} : memref<34x128xf32, #tpu.memory_space<vmem>>, vector<34x128xf32>,
    return
  }
  func.func @transform_0(%arg0: i32, %arg1: i32) -> (i32, i32) {
    %c0_i32 = arith.constant 0 : i32
    %c0_i32_0 = arith.constant 0 : i32
    return %arg1, %c0_i32 : i32, i32
  }
  func.func @transform_1(%arg0: i32, %arg1: i32) -> (i32, i32) {
    %c0_i32 = arith.constant 0 : i32
    %c0_i32_0 = arith.constant 0 : i32
    return %c0_i32, %arg0 : i32, i32
  }
  func.func @transform_2(%arg0: i32, %arg1: i32) -> (i32, i32) {
    %c0_i32 = arith.constant 0 : i32
    %c0_i32_0 = arith.constant 0 : i32
    return %c0_i32, %arg0 : i32, i32
  }
  func.func @transform_3(%arg0: i32, %arg1: i32) -> (i32, i32) {
    %c0_i32 = arith.constant 0 : i32
    return %arg1, %arg0 : i32, i32
  }
}

</mosaic_0001>

<llo_original>
// kernel: tpu_custom_call.1
$region0: #{tpu_custom_call.1}
  #allocation0 [shape = 'u32[]', space=smem, size = 0x4, offset = 0x4, fixed_abs, tag = 'smem constant byte address 0x4 - core index']
  #allocation1 [shape = 'u32[144,128]{1,0:T(1,128)}', space=vmem, size = 0x12000, scoped, tag = 'internal scratch']
  %s0 = inlined_call_operand.hbm [shape: f32[34,128], index: 0, kind: input, shape index: {}]
  %s1 = inlined_call_operand.hbm [shape: f32[128,128], index: 1, kind: input, shape index: {}]
  %s2 = inlined_call_operand.hbm [shape: f32[34,128], index: 2, kind: input, shape index: {}]
  %s3 = inlined_call_operand.hbm [shape: f32[34,128], index: 3, kind: output, shape index: {}]
  %s4 = sld [smem:[#allocation0]]
  $region34: #{tpu_custom_call.1} parent=0
    _
  %s6 = ssub.s32 1, %s4
  %s7 = scalar_select 0, %s6, %s4
  $region1: #{tpu_custom_call.1} parent=0
    #allocation2 [shape = 'u8[20480]{0}', space=vmem, size = 0x5000, scoped, tag = 'input window, operand 0, single buffered']
    #allocation3 [shape = 's32[1]{0}', space=sflag, size = 0x4, scoped, tag = 'scoped memory for tpu_custom_call.1']
    #allocation4 [shape = 's32[1]{0}', space=sflag, size = 0x4, scoped, tag = 'scoped memory for tpu_custom_call.1']
    #allocation5 [shape = 'u8[65536]{0}', space=vmem, size = 0x10000, scoped, tag = 'input window, operand 1, single buffered']
    #allocation6 [shape = 's32[1]{0}', space=sflag, size = 0x4, scoped, tag = 'scoped memory for tpu_custom_call.1']
    #allocation7 [shape = 'u8[20480]{0}', space=vmem, size = 0x5000, scoped, tag = 'input window, operand 2, single buffered']
    #allocation8 [shape = 'u8[20480]{0}', space=vmem, size = 0x5000, scoped, tag = 'output window, operand 0, single buffered']
    %8 = vsyncpa [#allocation3], 0
    %9 = vsyncpa [#allocation6], 0
    %10 = vsyncpa [#allocation4], 0
    // Predicated region
    $region2: #{tpu_custom_call.1} parent=1 // pred_check
      _
    $region3: #{tpu_custom_call.1} parent=1 // pred_check_branch
      %12 = sbr.rel (0) target = $region5
    $region4: #{tpu_custom_call.1} parent=1 // pred_region
      %s14 = ssub.s32 640, 640
      %15 = vsyncadd [#allocation3], %s14
      %s16 = sshll.u32 [#allocation2], 4
      %s17 = int_to_ptr.vmem [resolvable:$true] %s16
      %22 = dma.hbm_to_vmem [thread:$0]  %s0, 640, %s17, [#allocation3], 128, 128, 8
    $region5: #{tpu_custom_call.1} parent=1 // pred_fallthru
      _
    // Predicated region
    $region6: #{tpu_custom_call.1} parent=1 // pred_check
      _
    $region7: #{tpu_custom_call.1} parent=1 // pred_check_branch
      %24 = sbr.rel (0) target = $region9
    $region8: #{tpu_custom_call.1} parent=1 // pred_region
      %s26 = ssub.s32 2048, 2048
      %27 = vsyncadd [#allocation6], %s26
      %s28 = sshll.u32 [#allocation5], 4
      %s29 = int_to_ptr.vmem [resolvable:$true] %s28
      %34 = dma.hbm_to_vmem [thread:$0]  %s1, 2048, %s29, [#allocation6], 128, 128, 8
    $region9: #{tpu_custom_call.1} parent=1 // pred_fallthru
      _
    // Predicated region
    $region10: #{tpu_custom_call.1} parent=1 // pred_check
      _
    $region11: #{tpu_custom_call.1} parent=1 // pred_check_branch
      %36 = sbr.rel (0) target = $region13
    $region12: #{tpu_custom_call.1} parent=1 // pred_region
      %s38 = ssub.s32 640, 640
      %39 = vsyncadd [#allocation6], %s38
      %s40 = sshll.u32 [#allocation7], 4
      %s41 = int_to_ptr.vmem [resolvable:$true] %s40
      %46 = dma.hbm_to_vmem [thread:$0]  %s2, 640, %s41, [#allocation6], 128, 128, 8
    $region13: #{tpu_custom_call.1} parent=1 // pred_fallthru
      _
    // Predicated region
    $region14: #{tpu_custom_call.1} parent=1 // pred_check
      _
    $region15: #{tpu_custom_call.1} parent=1 // pred_check_branch
      %48 = sbr.rel (0) target = $region17
    $region16: #{tpu_custom_call.1} parent=1 // pred_region
      %49 = dma.done [#allocation3], 640
    $region17: #{tpu_custom_call.1} parent=1 // pred_fallthru
      _
    // Predicated region
    $region18: #{tpu_custom_call.1} parent=1 // pred_check
      _
    $region19: #{tpu_custom_call.1} parent=1 // pred_check_branch
      %51 = sbr.rel (0) target = $region21
    $region20: #{tpu_custom_call.1} parent=1 // pred_region
      %52 = dma.done [#allocation6], 2048
    $region21: #{tpu_custom_call.1} parent=1 // pred_fallthru
      _
    // Predicated region
    $region22: #{tpu_custom_call.1} parent=1 // pred_check
      _
    $region23: #{tpu_custom_call.1} parent=1 // pred_check_branch
      %54 = sbr.rel (0) target = $region25
    $region24: #{tpu_custom_call.1} parent=1 // pred_region
      %55 = dma.done [#allocation6], 640
    $region25: #{tpu_custom_call.1} parent=1 // pred_fallthru
      _
    %v56 = vld [vmem:[#allocation2] sm:$0xff]
    %v57 = vld [vmem:[#allocation2 + $0x8] sm:$0xff]
    %v58 = vld [vmem:[#allocation2 + $0x10] sm:$0xff]
    %v59 = vld [vmem:[#allocation2 + $0x18] sm:$0xff]
    %v60 = vld [vmem:[#allocation2 + $0x20] sm:$0x3]
    %v61 = vld [vmem:[#allocation5] sm:$0xff]
    %v62 = vld [vmem:[#allocation5 + $0x8] sm:$0xff]
    %v63 = vld [vmem:[#allocation5 + $0x10] sm:$0xff]
    %v64 = vld [vmem:[#allocation5 + $0x18] sm:$0xff]
    %v65 = vld [vmem:[#allocation5 + $0x20] sm:$0xff]
    %v66 = vld [vmem:[#allocation5 + $0x28] sm:$0xff]
    %v67 = vld [vmem:[#allocation5 + $0x30] sm:$0xff]
    %v68 = vld [vmem:[#allocation5 + $0x38] sm:$0xff]
    %v69 = vld [vmem:[#allocation5 + $0x40] sm:$0xff]
    %v70 = vld [vmem:[#allocation5 + $0x48] sm:$0xff]
    %v71 = vld [vmem:[#allocation5 + $0x50] sm:$0xff]
    %v72 = vld [vmem:[#allocation5 + $0x58] sm:$0xff]
    %v73 = vld [vmem:[#allocation5 + $0x60] sm:$0xff]
    %v74 = vld [vmem:[#allocation5 + $0x68] sm:$0xff]
    %v75 = vld [vmem:[#allocation5 + $0x70] sm:$0xff]
    %v76 = vld [vmem:[#allocation5 + $0x78] sm:$0xff]
    %v77 = vld [vmem:[#allocation7] sm:$0xff]
    %v78 = vld [vmem:[#allocation7 + $0x8] sm:$0xff]
    %v79 = vld [vmem:[#allocation7 + $0x10] sm:$0xff]
    %v80 = vld [vmem:[#allocation7 + $0x18] sm:$0xff]
    %v81 = vld [vmem:[#allocation7 + $0x20] sm:$0x3]
    %82 = vmatprep.subr.mxu0 0.0
    %83 = vmatpush1.msra.mxu0 %v61
    %84 = vmatprep.subr.mxu0 0.0
    %85 = vmatpush1.msra.mxu0 %v62
    %86 = vmatprep.subr.mxu0 0.0
    %87 = vmatpush1.msra.mxu0 %v63
    %88 = vmatprep.subr.mxu0 0.0
    %89 = vmatpush1.msra.mxu0 %v64
    %90 = vmatprep.subr.mxu0 0.0
    %91 = vmatpush1.msra.mxu0 %v65
    %92 = vmatprep.subr.mxu0 0.0
    %93 = vmatpush1.msra.mxu0 %v66
    %94 = vmatprep.subr.mxu0 0.0
    %95 = vmatpush1.msra.mxu0 %v67
    %96 = vmatprep.subr.mxu0 0.0
    %97 = vmatpush1.msra.mxu0 %v68
    %98 = vmatprep.subr.mxu0 0.0
    %99 = vmatpush1.msra.mxu0 %v69
    %100 = vmatprep.subr.mxu0 0.0
    %101 = vmatpush1.msra.mxu0 %v70
    %102 = vmatprep.subr.mxu0 0.0
    %103 = vmatpush1.msra.mxu0 %v71
    %104 = vmatprep.subr.mxu0 0.0
    %105 = vmatpush1.msra.mxu0 %v72
    %106 = vmatprep.subr.mxu0 0.0
    %107 = vmatpush1.msra.mxu0 %v73
    %108 = vmatprep.subr.mxu0 0.0
    %109 = vmatpush1.msra.mxu0 %v74
    %110 = vmatprep.subr.mxu0 0.0
    %111 = vmatpush1.msra.mxu0 %v75
    %112 = vmatprep.subr.mxu0 0.0
    %113 = vmatpush1.msra.mxu0 %v76
    %114 = vmatprep.subr.mxu0 0.0
    %115 = vmatpush1.msra.mxu0 0.0
    %116 = vmatprep.subr.mxu0 0.0
    %117 = vmatpush1.msra.mxu0 0.0
    %118 = vmatprep.subr.mxu0 0.0
    %119 = vmatpush1.msra.mxu0 0.0
    %120 = vmatprep.subr.mxu0 0.0
    %121 = vmatpush1.msra.mxu0 0.0
    %122 = vmatprep.subr.mxu0 0.0
    %123 = vmatpush1.msra.mxu0 0.0
    %124 = vmatprep.subr.mxu0 0.0
    %125 = vmatpush1.msra.mxu0 0.0
    %126 = vmatprep.subr.mxu0 0.0
    %127 = vmatpush1.msra.mxu0 0.0
    %128 = vmatprep.subr.mxu0 0.0
    %129 = vmatpush1.msra.mxu0 0.0
    %130 = vmatprep.subr.mxu0 0.0
    %131 = vmatpush1.msra.mxu0 0.0
    %132 = vmatprep.subr.mxu0 0.0
    %133 = vmatpush1.msra.mxu0 0.0
    %134 = vmatprep.subr.mxu0 0.0
    %135 = vmatpush1.msra.mxu0 0.0
    %136 = vmatprep.subr.mxu0 0.0
    %137 = vmatpush1.msra.mxu0 0.0
    %138 = vmatprep.subr.mxu0 0.0
    %139 = vmatpush1.msra.mxu0 0.0
    %140 = vmatprep.subr.mxu0 0.0
    %141 = vmatpush1.msra.mxu0 0.0
    %142 = vmatprep.subr.mxu0 0.0
    %143 = vmatpush1.msra.mxu0 0.0
    %144 = vmatprep.subr.mxu0 0.0
    %145 = vmatpush1.msra.mxu0 0.0
    %146 = vmatprep.mubr.f32.mxu0 0.0
    %147 = vmatmul.mubr.f32.gmra.mrb[0].mxu0 %v56
    %v148 = vpop.f32.mrb[0].mxu0
    %v149 = vadd.f32 %v77, %v148
    %v150 = vpop.f32.mrb[0].mxu0
    %151 = vmatprep.mubr.f32.mxu0 0.0
    %152 = vmatmul.mubr.f32.gmra.mrb[0].mxu0 %v57
    %v153 = vpop.f32.mrb[0].mxu0
    %v154 = vadd.f32 %v78, %v153
    %v155 = vpop.f32.mrb[0].mxu0
    %156 = vmatprep.mubr.f32.mxu0 0.0
    %157 = vmatmul.mubr.f32.gmra.mrb[0].mxu0 %v58
    %v158 = vpop.f32.mrb[0].mxu0
    %v159 = vadd.f32 %v79, %v158
    %v160 = vpop.f32.mrb[0].mxu0
    %161 = vmatprep.mubr.f32.mxu0 0.0
    %162 = vmatmul.mubr.f32.gmra.mrb[0].mxu0 %v59
    %v163 = vpop.f32.mrb[0].mxu0
    %v164 = vadd.f32 %v80, %v163
    %v165 = vpop.f32.mrb[0].mxu0
    %166 = vmatprep.mubr.f32.mxu0 0.0
    %167 = vmatmul.mubr.f32.gmra.mrb[0].mxu0 %v60
    %v168 = vpop.f32.mrb[0].mxu0
    %v169 = vadd.f32 %v81, %v168
    %v170 = vpop.f32.mrb[0].mxu0
    %171 = vdwg.mxu0
    %172 = vst [vmem:[#allocation8] sm:$0xff] %v149
    %173 = vst [vmem:[#allocation8 + $0x8] sm:$0xff] %v154
    %174 = vst [vmem:[#allocation8 + $0x10] sm:$0xff] %v159
    %175 = vst [vmem:[#allocation8 + $0x18] sm:$0xff] %v164
    %176 = vst [vmem:[#allocation8 + $0x20] sm:$0x3] %v169
    // Predicated region
    $region26: #{tpu_custom_call.1} parent=1 // pred_check
      _
    $region27: #{tpu_custom_call.1} parent=1 // pred_check_branch
      %178 = sbr.rel (0) target = $region29
    $region28: #{tpu_custom_call.1} parent=1 // pred_region
      %s180 = ssub.s32 640, 640
      %181 = vsyncadd [#allocation4], %s180
      %s182 = sshll.u32 [#allocation8], 4
      %s183 = int_to_ptr.vmem [resolvable:$true] %s182
      %188 = dma.vmem_to_hbm [thread:$0]  %s183, 640, %s3, [#allocation4], 128, 128, 8
    $region29: #{tpu_custom_call.1} parent=1 // pred_fallthru
      _
    // Predicated region
    $region30: #{tpu_custom_call.1} parent=1 // pred_check
      _
    $region31: #{tpu_custom_call.1} parent=1 // pred_check_branch
      %190 = sbr.rel (0) target = $region33
    $region32: #{tpu_custom_call.1} parent=1 // pred_region
      %191 = dma.done [#allocation4], 640
    $region33: #{tpu_custom_call.1} parent=1 // pred_fallthru
      _
    %192 = vsyncpa [#allocation3], 1
    %193 = vsyncpa [#allocation6], 1
    %194 = vsyncpa [#allocation4], 1

</llo_original>
